<compile_context>
chip_gen: v5e
topology: v5e:2x2
jax: 0.10.0
libtpu: 0.0.40
codegen_flags: <defaults>
</compile_context>

<pallas_src>
import numpy as np
import jax
import jax.numpy as jnp
from jax.experimental import pallas as pl
from jax.experimental.pallas import tpu as pltpu

# ----------------------------- model config ---------------------------------
X_DIM = 16
COND_DIM = 8
TIME_EMBED_DIM = 8
HIDDEN_DIM = 32
DIFFUSION_STEPS = 1000
BETA_START, BETA_END = 1e-4, 2e-2
HALF = TIME_EMBED_DIM // 2

MAX_BATCH_TILE = 16384        # rows (lanes) per grid step once the batch is large
SMALL_BATCH = 2 * 128         # below this, a single full-batch block


def _round_up(n, m):
    return ((n + m - 1) // m) * m


def _batch_tile(batch):
    """Lane-axis tile: full batch for small B (legal block == full dim);
    otherwise a 128-multiple tile giving >= 2 grid steps (v7x megacore),
    capped at MAX_BATCH_TILE."""
    if batch <= SMALL_BATCH:
        return batch
    half = pl.cdiv(batch, 2)
    return min(MAX_BATCH_TILE, _round_up(half, 128))


# ------------------------------ init / buffers -------------------------------
def make_buffers():
    """betas / alphas / alphas_bar buffers (registered but unused in forward)."""
    betas = jnp.linspace(BETA_START, BETA_END, DIFFUSION_STEPS, dtype=jnp.float32)
    alphas = 1.0 - betas
    alphas_bar = jnp.cumprod(alphas)
    return betas, alphas, alphas_bar


def make_params(key):
    """2-layer MLP 'nnet'.  W1 is pre-split into x / t_emb / cond row blocks."""
    k1, k2 = jax.random.split(key)
    d_in = X_DIM + TIME_EMBED_DIM + COND_DIM
    s1 = 1.0 / jnp.sqrt(jnp.float32(d_in))
    s2 = 1.0 / jnp.sqrt(jnp.float32(HIDDEN_DIM))
    w1 = jax.random.uniform(k1, (d_in, HIDDEN_DIM), jnp.float32, -s1, s1)
    b1 = jnp.zeros((1, HIDDEN_DIM), jnp.float32)
    w2 = jax.random.uniform(k2, (HIDDEN_DIM, X_DIM), jnp.float32, -s2, s2)
    b2 = jnp.zeros((1, X_DIM), jnp.float32)
    return dict(
        w1_x=w1[:X_DIM],
        w1_t=w1[X_DIM:X_DIM + TIME_EMBED_DIM],
        w1_c=w1[X_DIM + TIME_EMBED_DIM:],
        b1=b1, w2=w2, b2=b2,
    )


def _time_embed_consts():
    """Feature-major constants: freqs tiled twice (sin|cos halves) and a {0,1}
    cos-selector, both as (TIME_EMBED_DIM, 1) columns broadcast over lanes."""
    freqs = np.exp(-np.log(10000.0) * np.arange(HALF, dtype=np.float32) / HALF)
    freqs_col = np.concatenate([freqs, freqs]).reshape(TIME_EMBED_DIM, 1)
    cos_sel = np.concatenate(
        [np.zeros(HALF, np.float32), np.ones(HALF, np.float32)]
    ).reshape(TIME_EMBED_DIM, 1)
    return jnp.asarray(freqs_col), jnp.asarray(cos_sel)


# --------------------------- Pallas kernel -----------------------------------
def ddpm_mlp_kernel(x_ref, t_ref, cond_ref, freqs_ref, sel_ref,
                    w1x_ref, w1t_ref, w1c_ref, b1_ref, w2_ref, b2_ref,
                    out_ref):
    # Fused sinusoidal embedding, feature-major:
    #   rows [0, HALF) = sin(t*f), rows [HALF, 2*HALF) = cos(t*f).
    # sel is exactly {0.,1.} so the arithmetic blend reproduces
    # concat([sin, cos]) semantics; sin/cos ride the EUP slot (the kernel is
    # HBM/overhead bound, so this is effectively free).
    args = freqs_ref[...] * t_ref[...]                         # (8,1)*(1,tb) -> (8,tb)
    sel = sel_ref[...]                                         # (8,1) cos selector
    t_emb = sel * jnp.cos(args) + (1.0 - sel) * jnp.sin(args)  # (8, tb)

    # concat([x, t_emb, cond]) @ W1, computed transposed with a shared accumulator.
    h = jnp.dot(w1x_ref[...], x_ref[...], preferred_element_type=jnp.float32)
    h += jnp.dot(w1t_ref[...], t_emb, preferred_element_type=jnp.float32)
    h += jnp.dot(w1c_ref[...], cond_ref[...], preferred_element_type=jnp.float32)
    h = jnp.maximum(h + b1_ref[...], 0.0)                      # (32, tb) bias + ReLU

    o = jnp.dot(w2_ref[...], h, preferred_element_type=jnp.float32) + b2_ref[...]
    out_ref[...] = o.astype(out_ref.dtype)                     # (16, tb) lane-dense store


# ----------------------------- DDPM forward ----------------------------------
@jax.jit
def ddpm_forward(x, t, cond, params):
    """Predict noise: net(concat([x, sinusoidal_embedding(t), cond], dim=1)).
    Inputs are batch-major (B, d) like the PyTorch module; the wrapper presents
    them feature-major so the batch rides the 128-lane axis inside the kernel."""
    B = x.shape[0]
    tb = _batch_tile(B)

    freqs_col, cos_sel = _time_embed_consts()

    # Layout plumbing (callers that already hold feature-major data skip this).
    xT, tT, condT = x.T, t.T, cond.T
    w1xT, w1tT, w1cT = params["w1_x"].T, params["w1_t"].T, params["w1_c"].T
    b1T, w2T, b2T = params["b1"].T, params["w2"].T, params["b2"].T

    def batch_spec(d):                        # streams over the batch (lane) axis
        return pl.BlockSpec((d, tb), lambda i: (0, i))

    def resident_spec(shape):                 # same block every step -> stays in VMEM
        return pl.BlockSpec(shape, lambda i: (0, 0))

    weight_bytes = 4 * (HIDDEN_DIM * (X_DIM + TIME_EMBED_DIM + COND_DIM)  # W1
                        + HIDDEN_DIM                                      # b1
                        + HIDDEN_DIM * X_DIM + X_DIM                      # W2, b2
                        + 2 * TIME_EMBED_DIM)                             # consts
    cost = pl.CostEstimate(
        flops=2 * B * HIDDEN_DIM * (X_DIM + TIME_EMBED_DIM + COND_DIM + X_DIM),
        transcendentals=2 * TIME_EMBED_DIM * B,
        bytes_accessed=4 * B * (2 * X_DIM + 1 + COND_DIM) + weight_bytes,
    )

    outT = pl.pallas_call(
        ddpm_mlp_kernel,
        out_shape=jax.ShapeDtypeStruct((X_DIM, B), jnp.float32),
        grid=(pl.cdiv(B, tb),),                              # ragged tail clipped by Pallas
        in_specs=[
            batch_spec(X_DIM),                               # x^T        (16, tb)
            batch_spec(1),                                   # t^T        (1,  tb)
            batch_spec(COND_DIM),                            # cond^T     (8,  tb)
            resident_spec((TIME_EMBED_DIM, 1)),              # freqs column
            resident_spec((TIME_EMBED_DIM, 1)),              # cos selector column
            resident_spec((HIDDEN_DIM, X_DIM)),              # W1[:16]^T
            resident_spec((HIDDEN_DIM, TIME_EMBED_DIM)),     # W1[16:24]^T
            resident_spec((HIDDEN_DIM, COND_DIM)),           # W1[24:32]^T
            resident_spec((HIDDEN_DIM, 1)),                  # b1^T
            resident_spec((X_DIM, HIDDEN_DIM)),              # W2^T
            resident_spec((X_DIM, 1)),                       # b2^T
        ],
        out_specs=batch_spec(X_DIM),                         # out^T      (16, tb)
        compiler_params=pltpu.CompilerParams(
            dimension_semantics=("parallel",)),              # v7x: shard batch over 2 TCs
        cost_estimate=cost,
    )(xT, tT, condT, freqs_col, cos_sel,
      w1xT, w1tT, w1cT, b1T, w2T, b2T)
    return outT.T


# ------------------------------ reference ------------------------------------
def sinusoidal_embedding_ref(t, dim):
    half = dim // 2
    freqs = jnp.exp(-jnp.log(10000.0) * jnp.arange(half, dtype=jnp.float32) / half)
    args = t.astype(jnp.float32) * freqs[None, :]
    return jnp.concatenate([jnp.sin(args), jnp.cos(args)], axis=-1)


def ddpm_forward_ref(x, t, cond, params):
    w1 = jnp.concatenate([params["w1_x"], params["w1_t"], params["w1_c"]], axis=0)
    t_emb = sinusoidal_embedding_ref(t, TIME_EMBED_DIM)
    x_in = jnp.concatenate([x, t_emb, cond], axis=1)
    h = jnp.maximum(x_in @ w1 + params["b1"], 0.0)
    return h @ params["w2"] + params["b2"]


# --------------------------------- main --------------------------------------
if __name__ == "__main__":
    key = jax.random.PRNGKey(0)
    kx, kt, kc, kp, kx2, kt2, kc2 = jax.random.split(key, 7)

    params = make_params(kp)
    betas, alphas, alphas_bar = make_buffers()   # registered buffers (unused in forward)

    # Small-shape smoke test: single full-batch block, batch on the lane axis.
    B = 8
    x = jax.random.normal(kx, (B, X_DIM), jnp.float32)
    t_idx = jax.random.randint(kt, (B,), 0, DIFFUSION_STEPS)
    t = (t_idx.astype(jnp.float32) / DIFFUSION_STEPS)[:, None]   # normalized (B,1)
    cond = jax.random.normal(kc, (B, COND_DIM), jnp.float32)

    out = ddpm_forward(x, t, cond, params)
    jax.block_until_ready(out)
    ref = ddpm_forward_ref(x, t, cond, params)
    assert out.shape == (B, X_DIM)
    assert jnp.allclose(out, ref, atol=1e-5, rtol=1e-5), (
        float(jnp.max(jnp.abs(out - ref))))

    # Multi-block path: >=2 grid steps (v7x megacore) and a ragged last block
    # handled by Pallas clipping (no XLA-side pad / slice).
    B2 = 1500
    x2 = jax.random.normal(kx2, (B2, X_DIM), jnp.float32)
    t2 = (jax.random.randint(kt2, (B2,), 0, DIFFUSION_STEPS).astype(jnp.float32)
          / DIFFUSION_STEPS)[:, None]
    cond2 = jax.random.normal(kc2, (B2, COND_DIM), jnp.float32)

    out2 = ddpm_forward(x2, t2, cond2, params)
    jax.block_until_ready(out2)
    ref2 = ddpm_forward_ref(x2, t2, cond2, params)
    assert out2.shape == (B2, X_DIM)
    assert jnp.allclose(out2, ref2, atol=1e-5, rtol=1e-5), (
        float(jnp.max(jnp.abs(out2 - ref2))))

    print("KERNEL_OK")
</pallas_src>

<mosaic_0001>
module attributes {stable_mosaic.version = 11 : i64} {
  func.func @ddpm_mlp_kernel(%arg0: i32, %arg1: memref<16x8xf32, #tpu.memory_space<vmem>>, %arg2: memref<1x8xf32, #tpu.memory_space<vmem>>, %arg3: memref<8x8xf32, #tpu.memory_space<vmem>>, %arg4: memref<8x1xf32, #tpu.memory_space<vmem>>, %arg5: memref<8x1xf32, #tpu.memory_space<vmem>>, %arg6: memref<32x16xf32, #tpu.memory_space<vmem>>, %arg7: memref<32x8xf32, #tpu.memory_space<vmem>>, %arg8: memref<32x8xf32, #tpu.memory_space<vmem>>, %arg9: memref<32x1xf32, #tpu.memory_space<vmem>>, %arg10: memref<16x32xf32, #tpu.memory_space<vmem>>, %arg11: memref<16x1xf32, #tpu.memory_space<vmem>>, %arg12: memref<16x8xf32, #tpu.memory_space<vmem>>) attributes {dimension_semantics = [#tpu.dimension_semantics<parallel>], iteration_bounds = array<i64: 1>, scalar_prefetch = 0 : i64, scratch_operands = 0 : i64, tpu.core_type = #tpu.core_type<tc>, window_params = [{transform_indices = @transform_0, window_bounds = array<i64: 16, 8>}, {transform_indices = @transform_1, window_bounds = array<i64: 1, 8>}, {transform_indices = @transform_2, window_bounds = array<i64: 8, 8>}, {pipeline_mode = #tpu.pipeline_mode<synchronous>, transform_indices = @transform_3, window_bounds = array<i64: 8, 1>}, {pipeline_mode = #tpu.pipeline_mode<synchronous>, transform_indices = @transform_4, window_bounds = array<i64: 8, 1>}, {pipeline_mode = #tpu.pipeline_mode<synchronous>, transform_indices = @transform_5, window_bounds = array<i64: 32, 16>}, {pipeline_mode = #tpu.pipeline_mode<synchronous>, transform_indices = @transform_6, window_bounds = array<i64: 32, 8>}, {pipeline_mode = #tpu.pipeline_mode<synchronous>, transform_indices = @transform_7, window_bounds = array<i64: 32, 8>}, {pipeline_mode = #tpu.pipeline_mode<synchronous>, transform_indices = @transform_8, window_bounds = array<i64: 32, 1>}, {pipeline_mode = #tpu.pipeline_mode<synchronous>, transform_indices = @transform_9, window_bounds = array<i64: 16, 32>}, {pipeline_mode = #tpu.pipeline_mode<synchronous>, transform_indices = @transform_10, window_bounds = array<i64: 16, 1>}, {transform_indices = @transform_11, window_bounds = array<i64: 16, 8>}]} {
    %c0 = arith.constant 0 : index
    %c0_0 = arith.constant 0 : index
    %0 = vector.load %arg4[%c0, %c0_0] : memref<8x1xf32, #tpu.memory_space<vmem>>, vector<8x1xf32>
    %c0_1 = arith.constant 0 : index
    %c0_2 = arith.constant 0 : index
    %1 = vector.load %arg2[%c0_1, %c0_2] : memref<1x8xf32, #tpu.memory_space<vmem>>, vector<1x8xf32>
    %2 = vector.broadcast %0 : vector<8x1xf32> to vector<8x8xf32>
    %3 = vector.broadcast %1 : vector<1x8xf32> to vector<8x8xf32>
    %4 = arith.mulf %2, %3 : vector<8x8xf32>
    %c0_3 = arith.constant 0 : index
    %c0_4 = arith.constant 0 : index
    %5 = vector.load %arg5[%c0_3, %c0_4] : memref<8x1xf32, #tpu.memory_space<vmem>>, vector<8x1xf32>
    %6 = math.cos %4 : vector<8x8xf32>
    %7 = vector.broadcast %5 : vector<8x1xf32> to vector<8x8xf32>
    %8 = arith.mulf %7, %6 : vector<8x8xf32>
    %cst = arith.constant 1.000000e+00 : f32
    %9 = vector.broadcast %cst : f32 to vector<8x1xf32>
    %10 = arith.subf %9, %5 : vector<8x1xf32>
    %11 = math.sin %4 : vector<8x8xf32>
    %12 = vector.broadcast %10 : vector<8x1xf32> to vector<8x8xf32>
    %13 = arith.mulf %12, %11 : vector<8x8xf32>
    %14 = arith.addf %8, %13 : vector<8x8xf32>
    %c0_5 = arith.constant 0 : index
    %c0_6 = arith.constant 0 : index
    %15 = vector.load %arg6[%c0_5, %c0_6] : memref<32x16xf32, #tpu.memory_space<vmem>>, vector<32x16xf32>
    %c0_7 = arith.constant 0 : index
    %c0_8 = arith.constant 0 : index
    %16 = vector.load %arg1[%c0_7, %c0_8] : memref<16x8xf32, #tpu.memory_space<vmem>>, vector<16x8xf32>
    %cst_9 = arith.constant dense<0.000000e+00> : vector<32x8xf32>
    %17 = tpu.matmul %15, %16, %cst_9 {dimension_numbers = #tpu.dot_dimension_numbers<[1], [0], [0], [1], [0, 0, 1, 1], [], []>} : vector<32x16xf32>, vector<16x8xf32>, vector<32x8xf32> -> vector<32x8xf32>
    %c0_10 = arith.constant 0 : index
    %c0_11 = arith.constant 0 : index
    %18 = vector.load %arg7[%c0_10, %c0_11] : memref<32x8xf32, #tpu.memory_space<vmem>>, vector<32x8xf32>
    %cst_12 = arith.constant dense<0.000000e+00> : vector<32x8xf32>
    %19 = tpu.matmul %18, %14, %cst_12 {dimension_numbers = #tpu.dot_dimension_numbers<[1], [0], [0], [1], [0, 0, 1, 1], [], []>} : vector<32x8xf32>, vector<8x8xf32>, vector<32x8xf32> -> vector<32x8xf32>
    %20 = arith.addf %17, %19 : vector<32x8xf32>
    %c0_13 = arith.constant 0 : index
    %c0_14 = arith.constant 0 : index
    %21 = vector.load %arg8[%c0_13, %c0_14] : memref<32x8xf32, #tpu.memory_space<vmem>>, vector<32x8xf32>
    %c0_15 = arith.constant 0 : index
    %c0_16 = arith.constant 0 : index
    %22 = vector.load %arg3[%c0_15, %c0_16] : memref<8x8xf32, #tpu.memory_space<vmem>>, vector<8x8xf32>
    %cst_17 = arith.constant dense<0.000000e+00> : vector<32x8xf32>
    %23 = tpu.matmul %21, %22, %cst_17 {dimension_numbers = #tpu.dot_dimension_numbers<[1], [0], [0], [1], [0, 0, 1, 1], [], []>} : vector<32x8xf32>, vector<8x8xf32>, vector<32x8xf32> -> vector<32x8xf32>
    %24 = arith.addf %20, %23 : vector<32x8xf32>
    %c0_18 = arith.constant 0 : index
    %c0_19 = arith.constant 0 : index
    %25 = vector.load %arg9[%c0_18, %c0_19] : memref<32x1xf32, #tpu.memory_space<vmem>>, vector<32x1xf32>
    %26 = vector.broadcast %25 : vector<32x1xf32> to vector<32x8xf32>
    %27 = arith.addf %24, %26 : vector<32x8xf32>
    %cst_20 = arith.constant 0.000000e+00 : f32
    %28 = vector.broadcast %cst_20 : f32 to vector<32x8xf32>
    %29 = arith.maximumf %27, %28 : vector<32x8xf32>
    %c0_21 = arith.constant 0 : index
    %c0_22 = arith.constant 0 : index
    %30 = vector.load %arg10[%c0_21, %c0_22] : memref<16x32xf32, #tpu.memory_space<vmem>>, vector<16x32xf32>
    %cst_23 = arith.constant dense<0.000000e+00> : vector<16x8xf32>
    %31 = tpu.matmul %30, %29, %cst_23 {dimension_numbers = #tpu.dot_dimension_numbers<[1], [0], [0], [1], [0, 0, 1, 1], [], []>} : vector<16x32xf32>, vector<32x8xf32>, vector<16x8xf32> -> vector<16x8xf32>
    %c0_24 = arith.constant 0 : index
    %c0_25 = arith.constant 0 : index
    %32 = vector.load %arg11[%c0_24, %c0_25] : memref<16x1xf32, #tpu.memory_space<vmem>>, vector<16x1xf32>
    %33 = vector.broadcast %32 : vector<16x1xf32> to vector<16x8xf32>
    %34 = arith.addf %31, %33 : vector<16x8xf32>
    %c0_26 = arith.constant 0 : index
    %c0_27 = arith.constant 0 : index
    %35 = vector.load %arg12[%c0_26, %c0_27] : memref<16x8xf32, #tpu.memory_space<vmem>>, vector<16x8xf32>
    tpu.vector_store %arg12[%c0_26, %c0_27], %34 {strides = array<i32>} : memref<16x8xf32, #tpu.memory_space<vmem>>, vector<16x8xf32>,
    return
  }
  func.func @transform_0(%arg0: i32) -> (i32, i32) {
    %c0_i32 = arith.constant 0 : i32
    %c0_i32_0 = arith.constant 0 : i32
    return %c0_i32, %arg0 : i32, i32
  }
  func.func @transform_1(%arg0: i32) -> (i32, i32) {
    %c0_i32 = arith.constant 0 : i32
    %c0_i32_0 = arith.constant 0 : i32
    return %c0_i32, %arg0 : i32, i32
  }
  func.func @transform_2(%arg0: i32) -> (i32, i32) {
    %c0_i32 = arith.constant 0 : i32
    %c0_i32_0 = arith.constant 0 : i32
    return %c0_i32, %arg0 : i32, i32
  }
  func.func @transform_3(%arg0: i32) -> (i32, i32) {
    %c0_i32 = arith.constant 0 : i32
    %c0_i32_0 = arith.constant 0 : i32
    %c0_i32_1 = arith.constant 0 : i32
    return %c0_i32, %c0_i32_0 : i32, i32
  }
  func.func @transform_4(%arg0: i32) -> (i32, i32) {
    %c0_i32 = arith.constant 0 : i32
    %c0_i32_0 = arith.constant 0 : i32
    %c0_i32_1 = arith.constant 0 : i32
    return %c0_i32, %c0_i32_0 : i32, i32
  }
  func.func @transform_5(%arg0: i32) -> (i32, i32) {
    %c0_i32 = arith.constant 0 : i32
    %c0_i32_0 = arith.constant 0 : i32
    %c0_i32_1 = arith.constant 0 : i32
    return %c0_i32, %c0_i32_0 : i32, i32
  }
  func.func @transform_6(%arg0: i32) -> (i32, i32) {
    %c0_i32 = arith.constant 0 : i32
    %c0_i32_0 = arith.constant 0 : i32
    %c0_i32_1 = arith.constant 0 : i32
    return %c0_i32, %c0_i32_0 : i32, i32
  }
  func.func @transform_7(%arg0: i32) -> (i32, i32) {
    %c0_i32 = arith.constant 0 : i32
    %c0_i32_0 = arith.constant 0 : i32
    %c0_i32_1 = arith.constant 0 : i32
    return %c0_i32, %c0_i32_0 : i32, i32
  }
  func.func @transform_8(%arg0: i32) -> (i32, i32) {
    %c0_i32 = arith.constant 0 : i32
    %c0_i32_0 = arith.constant 0 : i32
    %c0_i32_1 = arith.constant 0 : i32
    return %c0_i32, %c0_i32_0 : i32, i32
  }
  func.func @transform_9(%arg0: i32) -> (i32, i32) {
    %c0_i32 = arith.constant 0 : i32
    %c0_i32_0 = arith.constant 0 : i32
    %c0_i32_1 = arith.constant 0 : i32
    return %c0_i32, %c0_i32_0 : i32, i32
  }
  func.func @transform_10(%arg0: i32) -> (i32, i32) {
    %c0_i32 = arith.constant 0 : i32
    %c0_i32_0 = arith.constant 0 : i32
    %c0_i32_1 = arith.constant 0 : i32
    return %c0_i32, %c0_i32_0 : i32, i32
  }
  func.func @transform_11(%arg0: i32) -> (i32, i32) {
    %c0_i32 = arith.constant 0 : i32
    %c0_i32_0 = arith.constant 0 : i32
    return %c0_i32, %arg0 : i32, i32
  }
}

</mosaic_0001>

<llo_original>
// kernel: ddpm_forward.1
$region0: #{ddpm_forward.1}
  #allocation0 [shape = 'u32[]', space=smem, size = 0x4, offset = 0x4, fixed_abs, tag = 'smem constant byte address 0x4 - core index']
  #allocation1 [shape = 'u32[72,128]{1,0:T(1,128)}', space=vmem, size = 0x9000, scoped, tag = 'internal scratch']
  %s0 = inlined_call_operand.vmem [shape: f32[16,8], index: 0, kind: input, shape index: {}]
  %s1 = inlined_call_operand.vmem [shape: f32[1,8], index: 1, kind: input, shape index: {}]
  %s2 = inlined_call_operand.vmem [shape: f32[8,8], index: 2, kind: input, shape index: {}]
  %s3 = inlined_call_operand.vmem [shape: f32[8,1], index: 3, kind: input, shape index: {}]
  %s4 = inlined_call_operand.vmem [shape: f32[8,1], index: 4, kind: input, shape index: {}]
  %s5 = inlined_call_operand.vmem [shape: f32[32,16], index: 5, kind: input, shape index: {}]
  %s6 = inlined_call_operand.vmem [shape: f32[32,8], index: 6, kind: input, shape index: {}]
  %s7 = inlined_call_operand.vmem [shape: f32[32,8], index: 7, kind: input, shape index: {}]
  %s8 = inlined_call_operand.vmem [shape: f32[32,1], index: 8, kind: input, shape index: {}]
  %s9 = inlined_call_operand.vmem [shape: f32[16,32], index: 9, kind: input, shape index: {}]
  %s10 = inlined_call_operand.vmem [shape: f32[16,1], index: 10, kind: input, shape index: {}]
  %s11 = inlined_call_operand.vmem [shape: f32[16,8], index: 11, kind: output, shape index: {}]
  %s12 = sld [smem:[#allocation0]]
  $region54: #{ddpm_forward.1} parent=0
    _
  %s14 = ssub.s32 1, %s12
  %s15 = scalar_select 0, %s14, %s12
  // Predicated region
  $region2: #{ddpm_forward.1} parent=0 // pred_check
    _
  $region3: #{ddpm_forward.1} parent=0 // pred_check_branch
    %17 = sbr.rel (0) target = $region5
  $region4: #{ddpm_forward.1} parent=0 // pred_region
    _
  $region5: #{ddpm_forward.1} parent=0 // pred_fallthru
    _
  // Predicated region
  $region6: #{ddpm_forward.1} parent=0 // pred_check
    _
  $region7: #{ddpm_forward.1} parent=0 // pred_check_branch
    %19 = sbr.rel (0) target = $region9
  $region8: #{ddpm_forward.1} parent=0 // pred_region
    _
  $region9: #{ddpm_forward.1} parent=0 // pred_fallthru
    _
  // Predicated region
  $region10: #{ddpm_forward.1} parent=0 // pred_check
    _
  $region11: #{ddpm_forward.1} parent=0 // pred_check_branch
    %21 = sbr.rel (0) target = $region13
  $region12: #{ddpm_forward.1} parent=0 // pred_region
    _
  $region13: #{ddpm_forward.1} parent=0 // pred_fallthru
    _
  // Predicated region
  $region14: #{ddpm_forward.1} parent=0 // pred_check
    _
  $region15: #{ddpm_forward.1} parent=0 // pred_check_branch
    %23 = sbr.rel (0) target = $region17
  $region16: #{ddpm_forward.1} parent=0 // pred_region
    _
  $region17: #{ddpm_forward.1} parent=0 // pred_fallthru
    _
  // Predicated region
  $region18: #{ddpm_forward.1} parent=0 // pred_check
    _
  $region19: #{ddpm_forward.1} parent=0 // pred_check_branch
    %25 = sbr.rel (0) target = $region21
  $region20: #{ddpm_forward.1} parent=0 // pred_region
    _
  $region21: #{ddpm_forward.1} parent=0 // pred_fallthru
    _
  // Predicated region
  $region22: #{ddpm_forward.1} parent=0 // pred_check
    _
  $region23: #{ddpm_forward.1} parent=0 // pred_check_branch
    %27 = sbr.rel (0) target = $region25
  $region24: #{ddpm_forward.1} parent=0 // pred_region
    _
  $region25: #{ddpm_forward.1} parent=0 // pred_fallthru
    _
  // Predicated region
  $region26: #{ddpm_forward.1} parent=0 // pred_check
    _
  $region27: #{ddpm_forward.1} parent=0 // pred_check_branch
    %29 = sbr.rel (0) target = $region29
  $region28: #{ddpm_forward.1} parent=0 // pred_region
    _
  $region29: #{ddpm_forward.1} parent=0 // pred_fallthru
    _
  // Predicated region
  $region30: #{ddpm_forward.1} parent=0 // pred_check
    _
  $region31: #{ddpm_forward.1} parent=0 // pred_check_branch
    %31 = sbr.rel (0) target = $region33
  $region32: #{ddpm_forward.1} parent=0 // pred_region
    _
  $region33: #{ddpm_forward.1} parent=0 // pred_fallthru
    _
  // Predicated region
  $region34: #{ddpm_forward.1} parent=0 // pred_check
    _
  $region35: #{ddpm_forward.1} parent=0 // pred_check_branch
    %33 = sbr.rel (0) target = $region37
  $region36: #{ddpm_forward.1} parent=0 // pred_region
    _
  $region37: #{ddpm_forward.1} parent=0 // pred_fallthru
    _
  // Predicated region
  $region38: #{ddpm_forward.1} parent=0 // pred_check
    _
  $region39: #{ddpm_forward.1} parent=0 // pred_check_branch
    %35 = sbr.rel (0) target = $region41
  $region40: #{ddpm_forward.1} parent=0 // pred_region
    _
  $region41: #{ddpm_forward.1} parent=0 // pred_fallthru
    _
  // Predicated region
  $region42: #{ddpm_forward.1} parent=0 // pred_check
    _
  $region43: #{ddpm_forward.1} parent=0 // pred_check_branch
    %37 = sbr.rel (0) target = $region45
  $region44: #{ddpm_forward.1} parent=0 // pred_region
    _
  $region45: #{ddpm_forward.1} parent=0 // pred_fallthru
    _
  %v38 = vld [vmem:[%s3] sm:$0xff]
  %v39 = vld [vmem:[%s1] sm:$0x1]
  %41 = vset.pattern.permute.xlu0 0
  %42 = vperm.xlu0 %41, %v38
  %v43 = vpop.permute.xlu0 %42
  %v46 = vperm.slane %v39, 0
  %v48 = vmul.f32 %v43, %v46
  %v49 = vld [vmem:[%s4] sm:$0xff]
  %v50 = vand.u32 2147483647, %v48
  %vm51 = vcmp.le.f32.partialorder %v50, 0.7853982
  %vm52 = vcmp.lt.s32.totalorder %v48, 0
  %v53 = vand.u32 %v48, 2139095040
  %v54 = vshrl.u32 %v53, 23
  %v55 = vsub.s32 %v54, 127
  %v56 = vand.u32 2147483647, %v48
  %v57 = vand.u32 %v56, 8388607
  %v58 = vor.u32 %v57, 8388608
  %v59 = vsub.s32 0, %v58
  %v60 = vadd.s32 %v55, 1
  %vm61 = vcmp.gt.s32.totalorder %v60, 0
  %v62 = vsel %vm61, %v60, 0
  %v63 = vshrl.u32 %v62, 5
  %v64 = vand.u32 %v62, 31
  %v65 = vsub.s32 32, %v64
  %v66 = vshrl.u32 683565275, %v65
  %v67 = vshll.u32 683565275, %v64
  %v68 = vshrl.u32 2475754826, %v65
  %v69 = vor.u32 %v67, %v68
  %v70 = vshll.u32 2475754826, %v64
  %v71 = vshrl.u32 2131351028, %v65
  %v72 = vor.u32 %v70, %v71
  %v73 = vshll.u32 2131351028, %v64
  %v74 = vshrl.u32 2102212464, %v65
  %v75 = vor.u32 %v73, %v74
  %v76 = vshll.u32 2102212464, %v64
  %v77 = vshrl.u32 920167782, %v65
  %v78 = vor.u32 %v76, %v77
  %v79 = vshll.u32 920167782, %v64
  %v80 = vshrl.u32 1326507024, %v65
  %v81 = vor.u32 %v79, %v80
  %vm82 = vcmp.lt.s32.totalorder %v63, 1
  %vm83 = vcmp.lt.s32.totalorder %v63, 2
  %vm84 = vcmp.lt.s32.totalorder %v63, 3
  %vm85 = vcmp.lt.s32.totalorder %v63, 4
  %v86 = vsel %vm82, %v66, %v69
  %v87 = vsel %vm85, %v75, 2102212464
  %v88 = vsel %vm84, %v72, %v87
  %v89 = vsel %vm83, %v86, %v88
  %v90 = vsel %vm82, %v69, %v72
  %v91 = vsel %vm85, %v78, 920167782
  %v92 = vsel %vm84, %v75, %v91
  %v93 = vsel %vm83, %v90, %v92
  %v94 = vsel %vm82, %v72, %v75
  %v95 = vsel %vm85, %v81, 1326507024
  %v96 = vsel %vm84, %v78, %v95
  %v97 = vsel %vm83, %v94, %v96
  %v98 = vshll.u32 %v58, 8
  %v99 = vand.u32 %v98, 65535
  %v100 = vshrl.u32 %v98, 16
  %v101 = vand.u32 %v97, 65535
  %v102 = vshrl.u32 %v97, 16
  %v103 = vmul.u32 %v99, %v101
  %v104 = vmul.u32 %v99, %v102
  %v105 = vmul.u32 %v100, %v101
  %v106 = vmul.u32 %v100, %v102
  %v107 = vshll.u32 %v104, 16
  %v108 = vshrl.u32 %v104, 16
  %v109 = vshll.u32 %v105, 16
  %v110 = vshrl.u32 %v105, 16
  %vm111 = vc.u32 %v103, %v107
  %v112 = vsel %vm111, 1, 0
  %v113 = vadd.s32 %v103, %v107
  %v114 = vadd.s32 %v106, %v112
  %vm115 = vc.u32 %v113, %v109
  %v116 = vsel %vm115, 1, 0
  %v117 = vadd.s32 %v113, %v109
  %v118 = vadd.s32 %v114, %v116
  %v119 = vadd.s32 %v118, %v108
  %v120 = vadd.s32 %v119, %v110
  %v121 = vand.u32 %v98, 65535
  %v122 = vshrl.u32 %v98, 16
  %v123 = vand.u32 %v93, 65535
  %v124 = vshrl.u32 %v93, 16
  %v125 = vmul.u32 %v121, %v123
  %v126 = vmul.u32 %v121, %v124
  %v127 = vmul.u32 %v122, %v123
  %v128 = vmul.u32 %v122, %v124
  %v129 = vshll.u32 %v126, 16
  %v130 = vshrl.u32 %v126, 16
  %v131 = vshll.u32 %v127, 16
  %v132 = vshrl.u32 %v127, 16
  %vm133 = vc.u32 %v125, %v129
  %v134 = vsel %vm133, 1, 0
  %v135 = vadd.s32 %v125, %v129
  %v136 = vadd.s32 %v128, %v134
  %vm137 = vc.u32 %v135, %v131
  %v138 = vsel %vm137, 1, 0
  %v139 = vadd.s32 %v135, %v131
  %v140 = vadd.s32 %v136, %v138
  %v141 = vadd.s32 %v140, %v130
  %v142 = vadd.s32 %v141, %v132
  %v143 = vmul.u32 %v98, %v89
  %v144 = vadd.s32 %v120, %v139
  %vm145 = vc.u32 %v120, %v139
  %v146 = vadd.s32 %v142, 1
  %v147 = vsel %vm145, %v146, %v142
  %v148 = vadd.s32 %v143, %v147
  %v149 = vadd.s32 %v148, 536870912
  %v150 = vshrl.u32 %v149, 30
  %v151 = vshll.u32 %v150, 30
  %v152 = vsub.s32 %v148, %v151
  %vm153 = vcmp.lt.s32.totalorder %v152, 0
  %v154 = vsub.s32 0, %v152
  %v155 = vsel %vm153, %v154, %v152
  %v156 = vclz %v155
  %v157 = vsub.s32 %v156, 2
  %vm158 = vcmp.gt.s32.totalorder 0, %v157
  %v159 = vsel %vm158, 0, %v157
  %v160 = vsub.s32 32, %v159
  %v161 = vshll.u32 %v152, %v159
  %v162 = vshrl.u32 %v144, %v160
  %v163 = vor.u32 %v161, %v162
  %v164 = vsub.s32 4294967266, %v159
  %v165 = vadd.s32 %v164, 127
  %v166 = vshll.u32 %v165, 23
  %v167 = vor.u32 4788187, %v166
  %v168 = vand.u32 2147483647, %v167
  %v170 = vcvt.s32.f32 %v163
  %v171 = vmul.f32 %v170, %v168
  %v172 = vxor.u32 %v171, 2147483648
  %v173 = vsel %vm52, %v172, %v171
  %v174 = vsub.s32 4, %v150
  %v175 = vsel %vm52, %v174, %v150
  %v176 = vsel %vm51, %v48, %v173
  %v177 = vsel %vm51, 0, %v175
  %v178 = vmul.f32 %v176, %v176
  %v179 = vmul.f32 %v178, -0.001358992
  %v180 = vadd.f32 %v179, 0.041655596
  %v181 = vmul.f32 %v178, %v180
  %v182 = vadd.f32 %v181, -0.4999988
  %v183 = vmul.f32 %v178, %v182
  %v184 = vadd.f32 1.0, %v183
  %v185 = vmul.f32 %v176, %v176
  %v186 = vmul.f32 %v185, -0.00019511016
  %v187 = vadd.f32 %v186, 0.008332121
  %v188 = vmul.f32 %v185, %v187
  %v189 = vadd.f32 %v188, -0.16666654
  %v190 = vmul.f32 %v185, %v189
  %v191 = vadd.f32 %v190, 1.0
  %v192 = vmul.f32 %v191, %v176
  %vm193 = vweird.f32 %v48
  %v194 = vand.u32 %v177, 3
  %vm195 = vcmp.lt.s32.totalorder %v194, 2
  %vm196 = vcmp.eq.s32.totalorder %v194, 0
  %v197 = vxor.u32 %v192, 2147483648
  %v198 = vsel %vm196, %v184, %v197
  %vm199 = vcmp.eq.s32.totalorder %v194, 2
  %v200 = vxor.u32 %v184, 2147483648
  %v201 = vsel %vm199, %v200, %v192
  %v202 = vsel %vm195, %v198, %v201
  %v203 = vsel %vm193, nan, %v202
  %205 = vset.pattern.permute.xlu0 0
  %206 = vperm.xlu0 %205, %v49
  %v207 = vpop.permute.xlu0 %206
  %v209 = vmul.f32 %v207, %v203
  %v210 = vsub.f32 1.0, %v49
  %v211 = vand.u32 2147483647, %v48
  %vm212 = vcmp.le.f32.partialorder %v211, 0.7853982
  %vm213 = vcmp.lt.s32.totalorder %v48, 0
  %v214 = vand.u32 %v48, 2139095040
  %v215 = vshrl.u32 %v214, 23
  %v216 = vsub.s32 %v215, 127
  %v217 = vand.u32 2147483647, %v48
  %v218 = vand.u32 %v217, 8388607
  %v219 = vor.u32 %v218, 8388608
  %v220 = vsub.s32 0, %v219
  %v221 = vadd.s32 %v216, 1
  %vm222 = vcmp.gt.s32.totalorder %v221, 0
  %v223 = vsel %vm222, %v221, 0
  %v224 = vshrl.u32 %v223, 5
  %v225 = vand.u32 %v223, 31
  %v226 = vsub.s32 32, %v225
  %v227 = vshrl.u32 683565275, %v226
  %v228 = vshll.u32 683565275, %v225
  %v229 = vshrl.u32 2475754826, %v226
  %v230 = vor.u32 %v228, %v229
  %v231 = vshll.u32 2475754826, %v225
  %v232 = vshrl.u32 2131351028, %v226
  %v233 = vor.u32 %v231, %v232
  %v234 = vshll.u32 2131351028, %v225
  %v235 = vshrl.u32 2102212464, %v226
  %v236 = vor.u32 %v234, %v235
  %v237 = vshll.u32 2102212464, %v225
  %v238 = vshrl.u32 920167782, %v226
  %v239 = vor.u32 %v237, %v238
  %v240 = vshll.u32 920167782, %v225
  %v241 = vshrl.u32 1326507024, %v226
  %v242 = vor.u32 %v240, %v241
  %vm243 = vcmp.lt.s32.totalorder %v224, 1
  %vm244 = vcmp.lt.s32.totalorder %v224, 2
  %vm245 = vcmp.lt.s32.totalorder %v224, 3
  %vm246 = vcmp.lt.s32.totalorder %v224, 4
  %v247 = vsel %vm243, %v227, %v230
  %v248 = vsel %vm246, %v236, 2102212464
  %v249 = vsel %vm245, %v233, %v248
  %v250 = vsel %vm244, %v247, %v249
  %v251 = vsel %vm243, %v230, %v233
  %v252 = vsel %vm246, %v239, 920167782
  %v253 = vsel %vm245, %v236, %v252
  %v254 = vsel %vm244, %v251, %v253
  %v255 = vsel %vm243, %v233, %v236
  %v256 = vsel %vm246, %v242, 1326507024
  %v257 = vsel %vm245, %v239, %v256
  %v258 = vsel %vm244, %v255, %v257
  %v259 = vshll.u32 %v219, 8
  %v260 = vand.u32 %v259, 65535
  %v261 = vshrl.u32 %v259, 16
  %v262 = vand.u32 %v258, 65535
  %v263 = vshrl.u32 %v258, 16
  %v264 = vmul.u32 %v260, %v262
  %v265 = vmul.u32 %v260, %v263
  %v266 = vmul.u32 %v261, %v262
  %v267 = vmul.u32 %v261, %v263
  %v268 = vshll.u32 %v265, 16
  %v269 = vshrl.u32 %v265, 16
  %v270 = vshll.u32 %v266, 16
  %v271 = vshrl.u32 %v266, 16
  %vm272 = vc.u32 %v264, %v268
  %v273 = vsel %vm272, 1, 0
  %v274 = vadd.s32 %v264, %v268
  %v275 = vadd.s32 %v267, %v273
  %vm276 = vc.u32 %v274, %v270
  %v277 = vsel %vm276, 1, 0
  %v278 = vadd.s32 %v274, %v270
  %v279 = vadd.s32 %v275, %v277
  %v280 = vadd.s32 %v279, %v269
  %v281 = vadd.s32 %v280, %v271
  %v282 = vand.u32 %v259, 65535
  %v283 = vshrl.u32 %v259, 16
  %v284 = vand.u32 %v254, 65535
  %v285 = vshrl.u32 %v254, 16
  %v286 = vmul.u32 %v282, %v284
  %v287 = vmul.u32 %v282, %v285
  %v288 = vmul.u32 %v283, %v284
  %v289 = vmul.u32 %v283, %v285
  %v290 = vshll.u32 %v287, 16
  %v291 = vshrl.u32 %v287, 16
  %v292 = vshll.u32 %v288, 16
  %v293 = vshrl.u32 %v288, 16
  %vm294 = vc.u32 %v286, %v290
  %v295 = vsel %vm294, 1, 0
  %v296 = vadd.s32 %v286, %v290
  %v297 = vadd.s32 %v289, %v295
  %vm298 = vc.u32 %v296, %v292
  %v299 = vsel %vm298, 1, 0
  %v300 = vadd.s32 %v296, %v292
  %v301 = vadd.s32 %v297, %v299
  %v302 = vadd.s32 %v301, %v291
  %v303 = vadd.s32 %v302, %v293
  %v304 = vmul.u32 %v259, %v250
  %v305 = vadd.s32 %v281, %v300
  %vm306 = vc.u32 %v281, %v300
  %v307 = vadd.s32 %v303, 1
  %v308 = vsel %vm306, %v307, %v303
  %v309 = vadd.s32 %v304, %v308
  %v310 = vadd.s32 %v309, 536870912
  %v311 = vshrl.u32 %v310, 30
  %v312 = vshll.u32 %v311, 30
  %v313 = vsub.s32 %v309, %v312
  %vm314 = vcmp.lt.s32.totalorder %v313, 0
  %v315 = vsub.s32 0, %v313
  %v316 = vsel %vm314, %v315, %v313
  %v317 = vclz %v316
  %v318 = vsub.s32 %v317, 2
  %vm319 = vcmp.gt.s32.totalorder 0, %v318
  %v320 = vsel %vm319, 0, %v318
  %v321 = vsub.s32 32, %v320
  %v322 = vshll.u32 %v313, %v320
  %v323 = vshrl.u32 %v305, %v321
  %v324 = vor.u32 %v322, %v323
  %v325 = vsub.s32 4294967266, %v320
  %v326 = vadd.s32 %v325, 127
  %v327 = vshll.u32 %v326, 23
  %v328 = vor.u32 4788187, %v327
  %v329 = vand.u32 2147483647, %v328
  %v331 = vcvt.s32.f32 %v324
  %v332 = vmul.f32 %v331, %v329
  %v333 = vxor.u32 %v332, 2147483648
  %v334 = vsel %vm213, %v333, %v332
  %v335 = vsub.s32 4, %v311
  %v336 = vsel %vm213, %v335, %v311
  %v337 = vsel %vm212, %v48, %v334
  %v338 = vsel %vm212, 0, %v336
  %v339 = vmul.f32 %v337, %v337
  %v340 = vmul.f32 %v339, -0.001358992
  %v341 = vadd.f32 %v340, 0.041655596
  %v342 = vmul.f32 %v339, %v341
  %v343 = vadd.f32 %v342, -0.4999988
  %v344 = vmul.f32 %v339, %v343
  %v345 = vadd.f32 1.0, %v344
  %v346 = vmul.f32 %v337, %v337
  %v347 = vmul.f32 %v346, -0.00019511016
  %v348 = vadd.f32 %v347, 0.008332121
  %v349 = vmul.f32 %v346, %v348
  %v350 = vadd.f32 %v349, -0.16666654
  %v351 = vmul.f32 %v346, %v350
  %v352 = vadd.f32 %v351, 1.0
  %v353 = vmul.f32 %v352, %v337
  %vm354 = vweird.f32 %v48
  %v355 = vadd.s32 %v338, 3
  %v356 = vand.u32 %v355, 3
  %vm357 = vcmp.lt.s32.totalorder %v356, 2
  %vm358 = vcmp.eq.s32.totalorder %v356, 0
  %v359 = vxor.u32 %v353, 2147483648
  %v360 = vsel %vm358, %v345, %v359
  %vm361 = vcmp.eq.s32.totalorder %v356, 2
  %v362 = vxor.u32 %v345, 2147483648
  %v363 = vsel %vm361, %v362, %v353
  %v364 = vsel %vm357, %v360, %v363
  %v365 = vsel %vm354, nan, %v364
  %367 = vset.pattern.permute.xlu0 0
  %368 = vperm.xlu0 %367, %v210
  %v369 = vpop.permute.xlu0 %368
  %v371 = vmul.f32 %v369, %v365
  %v372 = vadd.f32 %v209, %v371
  %v373 = vld [vmem:[%s5] sm:$0xff]
  %v374 = vld [vmem:[%s5 + $0x8] sm:$0xff]
  %v375 = vld [vmem:[%s5 + $0x10] sm:$0xff]
  %v376 = vld [vmem:[%s5 + $0x18] sm:$0xff]
  %v377 = vld [vmem:[%s0] sm:$0xff]
  %v378 = vld [vmem:[%s0 + $0x8] sm:$0xff]
  %v379 = vld [vmem:[%s6] sm:$0xff]
  %v380 = vld [vmem:[%s6 + $0x8] sm:$0xff]
  %v381 = vld [vmem:[%s6 + $0x10] sm:$0xff]
  %v382 = vld [vmem:[%s6 + $0x18] sm:$0xff]
  %vm383 = vcmask 64512
  %v385 = vsel %vm383, %v379, 0
  %v388 = vsel %vm383, %v380, 0
  %v391 = vsel %vm383, %v381, 0
  %v394 = vsel %vm383, %v382, 0
  %396 = vmatpush.msra.mxu0 0.0
  %397 = vmatpush.msra.mxu0 0.0
  %398 = vmatpush.msra.mxu0 0.0
  %399 = vmatpush.msra.mxu0 0.0
  %400 = vmatpush.msra.mxu0 0.0
  %401 = vmatpush.msra.mxu0 0.0
  %402 = vmatpush.msra.mxu0 0.0
  %403 = vmatpush.msra.mxu0 0.0
  %404 = vmatpush.msra.mxu0 0.0
  %405 = vmatpush.msra.mxu0 0.0
  %406 = vmatpush.msra.mxu0 0.0
  %407 = vmatpush.msra.mxu0 0.0
  %408 = vmatpush.msra.mxu0 0.0
  %409 = vmatpush.msra.mxu0 0.0
  %410 = vmatpush.msra.mxu0 0.0
  %411 = vmatpush.msra.mxu0 %v372
  %412 = vmatmul.f32.gmra.mxu0 %v385
  %v413 = vpop.f32.mrf.mxu0
  %v414 = vadd.f32 0.0, %v413
  %415 = vmatmul.f32.gmra.mxu0 %v388
  %v416 = vpop.f32.mrf.mxu0
  %v417 = vadd.f32 0.0, %v416
  %418 = vmatmul.f32.gmra.mxu0 %v391
  %v419 = vpop.f32.mrf.mxu0
  %v420 = vadd.f32 0.0, %v419
  %421 = vmatmul.f32.gmra.mxu0 %v394
  %v422 = vpop.f32.mrf.mxu0
  %v423 = vadd.f32 0.0, %v422
  %424 = vdwg.mxu0
  %vm425 = vcmask 130048
  %v427 = vsel %vm425, %v373, 0
  %v430 = vsel %vm425, %v374, 0
  %v433 = vsel %vm425, %v375, 0
  %v436 = vsel %vm425, %v376, 0
  %438 = vmatpush.msra.mxu0 0.0
  %439 = vmatpush.msra.mxu0 0.0
  %440 = vmatpush.msra.mxu0 0.0
  %441 = vmatpush.msra.mxu0 0.0
  %442 = vmatpush.msra.mxu0 0.0
  %443 = vmatpush.msra.mxu0 0.0
  %444 = vmatpush.msra.mxu0 0.0
  %445 = vmatpush.msra.mxu0 0.0
  %446 = vmatpush.msra.mxu0 0.0
  %447 = vmatpush.msra.mxu0 0.0
  %448 = vmatpush.msra.mxu0 0.0
  %449 = vmatpush.msra.mxu0 0.0
  %450 = vmatpush.msra.mxu0 0.0
  %451 = vmatpush.msra.mxu0 0.0
  %452 = vmatpush.msra.mxu0 %v378
  %453 = vmatpush.msra.mxu0 %v377
  %454 = vmatmul.f32.gmra.mxu0 %v427
  %v455 = vpop.f32.mrf.mxu0
  %v456 = vadd.f32 %v414, %v455
  %457 = vmatmul.f32.gmra.mxu0 %v430
  %v458 = vpop.f32.mrf.mxu0
  %v459 = vadd.f32 %v417, %v458
  %460 = vmatmul.f32.gmra.mxu0 %v433
  %v461 = vpop.f32.mrf.mxu0
  %v462 = vadd.f32 %v420, %v461
  %463 = vmatmul.f32.gmra.mxu0 %v436
  %v464 = vpop.f32.mrf.mxu0
  %v465 = vadd.f32 %v423, %v464
  %466 = vdwg.mxu0
  %v467 = vld [vmem:[%s7] sm:$0xff]
  %v468 = vld [vmem:[%s7 + $0x8] sm:$0xff]
  %v469 = vld [vmem:[%s7 + $0x10] sm:$0xff]
  %v470 = vld [vmem:[%s7 + $0x18] sm:$0xff]
  %v471 = vld [vmem:[%s2] sm:$0xff]
  %v473 = vsel %vm383, %v467, 0
  %v476 = vsel %vm383, %v468, 0
  %v479 = vsel %vm383, %v469, 0
  %v482 = vsel %vm383, %v470, 0
  %484 = vmatpush.msra.mxu0 0.0
  %485 = vmatpush.msra.mxu0 0.0
  %486 = vmatpush.msra.mxu0 0.0
  %487 = vmatpush.msra.mxu0 0.0
  %488 = vmatpush.msra.mxu0 0.0
  %489 = vmatpush.msra.mxu0 0.0
  %490 = vmatpush.msra.mxu0 0.0
  %491 = vmatpush.msra.mxu0 0.0
  %492 = vmatpush.msra.mxu0 0.0
  %493 = vmatpush.msra.mxu0 0.0
  %494 = vmatpush.msra.mxu0 0.0
  %495 = vmatpush.msra.mxu0 0.0
  %496 = vmatpush.msra.mxu0 0.0
  %497 = vmatpush.msra.mxu0 0.0
  %498 = vmatpush.msra.mxu0 0.0
  %499 = vmatpush.msra.mxu0 %v471
  %500 = vmatmul.f32.gmra.mxu0 %v473
  %v501 = vpop.f32.mrf.mxu0
  %v502 = vadd.f32 0.0, %v501
  %503 = vmatmul.f32.gmra.mxu0 %v476
  %v504 = vpop.f32.mrf.mxu0
  %v505 = vadd.f32 0.0, %v504
  %506 = vmatmul.f32.gmra.mxu0 %v479
  %v507 = vpop.f32.mrf.mxu0
  %v508 = vadd.f32 0.0, %v507
  %509 = vmatmul.f32.gmra.mxu0 %v482
  %v510 = vpop.f32.mrf.mxu0
  %v511 = vadd.f32 0.0, %v510
  %512 = vdwg.mxu0
  %v513 = vadd.f32 %v456, %v502
  %v514 = vadd.f32 %v459, %v505
  %v515 = vadd.f32 %v462, %v508
  %v516 = vadd.f32 %v465, %v511
  %v517 = vld [vmem:[%s8] sm:$0xff]
  %v518 = vld [vmem:[%s8 + $0x8] sm:$0xff]
  %v519 = vld [vmem:[%s8 + $0x10] sm:$0xff]
  %v520 = vld [vmem:[%s8 + $0x18] sm:$0xff]
  %522 = vset.pattern.permute.xlu0 0
  %523 = vperm.xlu0 %522, %v517
  %v524 = vpop.permute.xlu0 %523
  %527 = vset.pattern.permute.xlu0 0
  %528 = vperm.xlu0 %527, %v518
  %v529 = vpop.permute.xlu0 %528
  %532 = vset.pattern.permute.xlu0 0
  %533 = vperm.xlu0 %532, %v519
  %v534 = vpop.permute.xlu0 %533
  %537 = vset.pattern.permute.xlu0 0
  %538 = vperm.xlu0 %537, %v520
  %v539 = vpop.permute.xlu0 %538
  %v541 = vadd.f32 %v513, %v524
  %v542 = vadd.f32 %v514, %v529
  %v543 = vadd.f32 %v515, %v534
  %v544 = vadd.f32 %v516, %v539
  %v545 = vmax.f32 %v541, 0.0
  %v546 = vmax.f32 %v542, 0.0
  %v547 = vmax.f32 %v543, 0.0
  %v548 = vmax.f32 %v544, 0.0
  %v549 = vld [vmem:[%s9] sm:$0xff]
  %v550 = vld [vmem:[%s9 + $0x8] sm:$0xff]
  %v551 = vld [vmem:[%s10] sm:$0xff]
  %v552 = vld [vmem:[%s10 + $0x8] sm:$0xff]
  %554 = vset.pattern.permute.xlu0 0
  %555 = vperm.xlu0 %554, %v551
  %v556 = vpop.permute.xlu0 %555
  %559 = vset.pattern.permute.xlu0 0
  %560 = vperm.xlu0 %559, %v552
  %v561 = vpop.permute.xlu0 %560
  %vm563 = vcmask 261120
  %v565 = vsel %vm563, %v549, 0
  %v568 = vsel %vm563, %v550, 0
  %570 = vmatpush.msra.mxu0 0.0
  %571 = vmatpush.msra.mxu0 0.0
  %572 = vmatpush.msra.mxu0 0.0
  %573 = vmatpush.msra.mxu0 0.0
  %574 = vmatpush.msra.mxu0 0.0
  %575 = vmatpush.msra.mxu0 0.0
  %576 = vmatpush.msra.mxu0 0.0
  %577 = vmatpush.msra.mxu0 0.0
  %578 = vmatpush.msra.mxu0 0.0
  %579 = vmatpush.msra.mxu0 0.0
  %580 = vmatpush.msra.mxu0 0.0
  %581 = vmatpush.msra.mxu0 0.0
  %582 = vmatpush.msra.mxu0 %v548
  %583 = vmatpush.msra.mxu0 %v547
  %584 = vmatpush.msra.mxu0 %v546
  %585 = vmatpush.msra.mxu0 %v545
  %586 = vmatmul.f32.gmra.mxu0 %v565
  %v587 = vpop.f32.mrf.mxu0
  %v588 = vadd.f32 %v556, %v587
  %589 = vmatmul.f32.gmra.mxu0 %v568
  %v590 = vpop.f32.mrf.mxu0
  %v591 = vadd.f32 %v561, %v590
  %592 = vdwg.mxu0
  %593 = vst.msk [vmem:[%s11] sm:$0xff] %vm383, %v588
  %594 = vst.msk [vmem:[%s11 + $0x8] sm:$0xff] %vm383, %v591
  // Predicated region
  $region46: #{ddpm_forward.1} parent=0 // pred_check
    _
  $region47: #{ddpm_forward.1} parent=0 // pred_check_branch
    %596 = sbr.rel (0) target = $region49
  $region48: #{ddpm_forward.1} parent=0 // pred_region
    _
  $region49: #{ddpm_forward.1} parent=0 // pred_fallthru
    _
  // Predicated region
  $region50: #{ddpm_forward.1} parent=0 // pred_check
    _
  $region51: #{ddpm_forward.1} parent=0 // pred_check_branch
    %598 = sbr.rel (0) target = $region53
  $region52: #{ddpm_forward.1} parent=0 // pred_region
    _
  $region53: #{ddpm_forward.1} parent=0 // pred_fallthru
    _

</llo_original>
